<compile_context>
chip_gen: v5e
topology: v5e:2x2
jax: 0.10.0
libtpu: 0.0.40
codegen_flags: <defaults>
</compile_context>

<pallas_src>
import jax
import jax.numpy as jnp
from jax.experimental import pallas as pl
from jax.experimental.pallas import tpu as pltpu


def _make_kernel(TL, P, K, D, C_in, C_out, has_downsample, multi_tile):
    """Build the per-(batch, time-tile) kernel with all shapes closed over."""
    W1H = TL + P       # h1 columns computed per tile (tile + causal halo for conv2)
    HALO = 2 * P       # x columns needed from the previous tile
    use_prev = multi_tile and P > 0

    def body(t, cur, halo, wc_ref, b1_ref, w2_ref, b2_ref, bd_ref, o_ref):
        # cur:  (C_in, TL) current time tile (compute dtype, e.g. bf16)
        # halo: (C_in, 2P) causal halo columns (zeros on tile 0)
        xwin = jnp.concatenate([halo, cur], axis=1) if HALO > 0 else cur   # (C_in, TL+2P)

        # ---- conv1 (+ fused 1x1 downsample): one wide-contraction MXU matmul ----
        if K > 1:
            x_stack = jnp.concatenate(
                [xwin[:, j * D:j * D + W1H] for j in range(K)], axis=0)    # (K*C_in, TL+P)
        else:
            x_stack = xwin
        comb = jnp.dot(wc_ref[...], x_stack,
                       preferred_element_type=jnp.float32)                 # (RW, TL+P) f32
        h1 = jnp.maximum(comb[:C_out, :] + b1_ref[...], 0.0)               # (C_out, TL+P)

        # conv2 consumes the *chomped* conv1 output left-padded with true zeros.
        # The first P h1 columns correspond to times < tile_start; on the first
        # tile those are negative times and must be exactly zero (NOT relu(b1)).
        if P > 0:
            col = jax.lax.broadcasted_iota(jnp.int32, (C_out, W1H), 1)
            keep = jnp.logical_or(t > 0, col >= P) if multi_tile else (col >= P)
            h1 = jnp.where(keep, h1, 0.0)

        if has_downsample:
            # Residual rows were fused into the same matmul; take the TL output columns.
            res = comb[C_out:, P:] + bd_ref[...]                           # (C_out, TL) f32
        else:
            res = xwin[:, HALO:].astype(jnp.float32)                       # identity (C_in == C_out)

        # ---- conv2: im2col over the K dilated taps of h1 -> one MXU matmul ----
        h1c = h1.astype(w2_ref.dtype)
        if K > 1:
            h1_stack = jnp.concatenate(
                [h1c[:, j * D:j * D + TL] for j in range(K)], axis=0)      # (K*C_out, TL)
        else:
            h1_stack = h1c
        pre2 = jnp.dot(w2_ref[...], h1_stack,
                       preferred_element_type=jnp.float32)                 # (C_out, TL)
        h2 = jnp.maximum(pre2 + b2_ref[...], 0.0)

        o_ref[0] = jnp.maximum(h2 + res, 0.0).astype(o_ref.dtype)

    if use_prev:
        def kernel(xc_ref, xp_ref, wc_ref, b1_ref, w2_ref, b2_ref, bd_ref, o_ref):
            t = pl.program_id(1)
            cur = xc_ref[0]                                   # (C_in, TL)
            # Causal halo: last 2P time steps of the previous tile; zeros on tile 0.
            prev_tail = xp_ref[0, :, TL - HALO:]
            halo = jnp.where(t > 0, prev_tail, jnp.zeros_like(prev_tail))
            body(t, cur, halo, wc_ref, b1_ref, w2_ref, b2_ref, bd_ref, o_ref)
        return kernel, True
    else:
        def kernel(xc_ref, wc_ref, b1_ref, w2_ref, b2_ref, bd_ref, o_ref):
            cur = xc_ref[0]                                   # (C_in, TL)
            halo = jnp.zeros((C_in, HALO), cur.dtype)         # pure causal zero padding
            body(0, cur, halo, wc_ref, b1_ref, w2_ref, b2_ref, bd_ref, o_ref)
        return kernel, False


def temporal_block_forward(x_ncl, params, *, kernel_size, dilation, padding,
                           compute_dtype=jnp.bfloat16, time_tile=None):
    """x_ncl: (N, C_in, L) float32 (PyTorch NCL layout). Returns (N, C_out, L) f32."""
    N, C_in, L = x_ncl.shape
    K, D, P = kernel_size, dilation, padding
    w1, b1, w2, b2, wd, bd = params          # PyTorch layouts: w (C_out, C_in, K)
    C_out = w1.shape[0]
    has_downsample = wd is not None
    if not has_downsample and C_in != C_out:
        raise ValueError("identity residual requires C_in == C_out")
    if P != (K - 1) * D:
        raise ValueError("kernel assumes causal TCN padding: padding == (K-1)*dilation")

    # ---- time-axis tiling (bounds VMEM for long sequences) ----
    if time_tile is None:
        TL = L if L <= 512 else 512
        while L > TL and TL < 2 * P:         # multi-tile halo must fit in one tile
            TL *= 2
    else:
        TL = int(time_tile)
    num_tiles = pl.cdiv(L, TL)
    if num_tiles > 1 and TL < 2 * P:
        raise ValueError("time_tile must be >= 2*padding when the time axis is tiled")
    Lp = num_tiles * TL
    x_in = x_ncl if Lp == L else jnp.pad(x_ncl, ((0, 0), (0, 0), (0, Lp - L)))
    x_in = x_in.astype(compute_dtype)

    # ---- matmul-friendly weight layouts (im2col, tap-major columns) ----
    f32 = jnp.float32
    w1_mat = jnp.transpose(w1, (0, 2, 1)).reshape(C_out, K * C_in)        # (C_out, K*C_in)
    w2_mat = jnp.transpose(w2, (0, 2, 1)).reshape(C_out, K * C_out).astype(compute_dtype)
    if has_downsample:
        wd_mat = wd[:, :, 0]                                              # (C_out, C_in)
        wd_rows = jnp.concatenate(
            [jnp.zeros((C_out, (K - 1) * C_in), w1_mat.dtype), wd_mat], axis=1)
        wc = jnp.concatenate([w1_mat, wd_rows], axis=0)                   # (2*C_out, K*C_in)
        bdk = bd.reshape(C_out, 1).astype(f32)
    else:
        wc = w1_mat
        bdk = jnp.zeros((C_out, 1), f32)
    wc = wc.astype(compute_dtype)
    b1k = b1.reshape(C_out, 1).astype(f32)
    b2k = b2.reshape(C_out, 1).astype(f32)
    RW = wc.shape[0]

    kernel, use_prev = _make_kernel(TL, P, K, D, C_in, C_out, has_downsample,
                                    multi_tile=(num_tiles > 1))

    in_specs = [pl.BlockSpec((1, C_in, TL), lambda b, t: (b, 0, t))]   # current time tile
    args = [x_in]
    if use_prev:
        # previous time tile (supplies the causal halo; masked to zero for t==0)
        in_specs.append(pl.BlockSpec((1, C_in, TL), lambda b, t: (b, 0, jnp.maximum(t - 1, 0))))
        args.append(x_in)
    in_specs += [
        pl.BlockSpec((RW, K * C_in), lambda b, t: (0, 0)),
        pl.BlockSpec((C_out, 1), lambda b, t: (0, 0)),
        pl.BlockSpec((C_out, K * C_out), lambda b, t: (0, 0)),
        pl.BlockSpec((C_out, 1), lambda b, t: (0, 0)),
        pl.BlockSpec((C_out, 1), lambda b, t: (0, 0)),
    ]
    args += [wc, b1k, w2_mat, b2k, bdk]

    out = pl.pallas_call(
        kernel,
        out_shape=jax.ShapeDtypeStruct((N, C_out, Lp), f32),
        grid_spec=pltpu.PrefetchScalarGridSpec(
            num_scalar_prefetch=0,
            grid=(N, num_tiles),
            in_specs=in_specs,
            out_specs=pl.BlockSpec((1, C_out, TL), lambda b, t: (b, 0, t)),
        ),
        compiler_params=pltpu.CompilerParams(
            dimension_semantics=("parallel", "parallel"),
            vmem_limit_bytes=48 * 1024 * 1024,   # headroom within v7x's 64 MiB physical VMEM
        ),
    )(*args)

    return out[:, :, :L] if Lp != L else out


if __name__ == "__main__":
    key = jax.random.PRNGKey(0)

    def run_case(k, N, C_in, C_out, L, K, D, use_downsample, time_tile=None):
        P = (K - 1) * D
        ks = jax.random.split(k, 7)
        w1 = 0.01 * jax.random.normal(ks[0], (C_out, C_in, K), jnp.float32)
        w2 = 0.01 * jax.random.normal(ks[1], (C_out, C_out, K), jnp.float32)
        b1 = jax.random.uniform(ks[2], (C_out,), jnp.float32,
                                -1.0 / (C_in * K) ** 0.5, 1.0 / (C_in * K) ** 0.5)
        b2 = jax.random.uniform(ks[3], (C_out,), jnp.float32,
                                -1.0 / (C_out * K) ** 0.5, 1.0 / (C_out * K) ** 0.5)
        if use_downsample:
            wd = 0.01 * jax.random.normal(ks[4], (C_out, C_in, 1), jnp.float32)
            bd = jax.random.uniform(ks[5], (C_out,), jnp.float32,
                                    -1.0 / C_in ** 0.5, 1.0 / C_in ** 0.5)
        else:
            wd, bd = None, None
        x = jax.random.normal(ks[6], (N, C_in, L), jnp.float32)

        out = temporal_block_forward(x, (w1, b1, w2, b2, wd, bd),
                                     kernel_size=K, dilation=D, padding=P,
                                     time_tile=time_tile)
        out = jax.block_until_ready(out)

        # ---- pure-JAX reference, emulating the kernel's bf16-in / f32-accum path ----
        rnd = lambda a: a.astype(jnp.bfloat16).astype(jnp.float32)

        def conv1d(x_ncl, w, b, dil, pad):
            y = jax.lax.conv_general_dilated(
                x_ncl, w, window_strides=(1,), padding=[(pad, pad)],
                rhs_dilation=(dil,), dimension_numbers=("NCH", "OIH", "NCH"),
                precision=jax.lax.Precision.HIGHEST)
            return y + b[None, :, None]

        xr = rnd(x)
        h = jax.nn.relu(conv1d(xr, rnd(w1), b1, D, P)[:, :, :L])
        h = rnd(h)   # kernel feeds h1 to the second MXU matmul in bf16
        h = jax.nn.relu(conv1d(h, rnd(w2), b2, D, P)[:, :, :L])
        res = conv1d(xr, rnd(wd), bd, 1, 0) if use_downsample else xr
        ref = jax.nn.relu(h + res)

        assert out.shape == (N, C_out, L), out.shape
        err = jnp.max(jnp.abs(out - ref))
        assert jnp.allclose(out, ref, atol=1e-4, rtol=1e-3), f"max abs err {err}"

    k1, k2 = jax.random.split(key)
    # Case 1: TemporalBlock(4 -> 8, K=3, dilation=2) with 1x1 downsample, single time tile.
    run_case(k1, N=2, C_in=4, C_out=8, L=16, K=3, D=2, use_downsample=True)
    # Case 2: identity residual (8 -> 8) with a tiled time axis (exercises the halo path).
    run_case(k2, N=2, C_in=8, C_out=8, L=256, K=3, D=2, use_downsample=False, time_tile=128)

    print("KERNEL_OK")
</pallas_src>

<mosaic_0001>
module attributes {stable_mosaic.version = 11 : i64} {
  func.func @kernel(%arg0: i32, %arg1: i32, %arg2: memref<1x4x16xbf16, #tpu.memory_space<vmem>>, %arg3: memref<16x12xbf16, #tpu.memory_space<vmem>>, %arg4: memref<8x1xf32, #tpu.memory_space<vmem>>, %arg5: memref<8x24xbf16, #tpu.memory_space<vmem>>, %arg6: memref<8x1xf32, #tpu.memory_space<vmem>>, %arg7: memref<8x1xf32, #tpu.memory_space<vmem>>, %arg8: memref<1x8x16xf32, #tpu.memory_space<vmem>>) attributes {dimension_semantics = [#tpu.dimension_semantics<parallel>, #tpu.dimension_semantics<parallel>], iteration_bounds = array<i64: 2, 1>, scalar_prefetch = 0 : i64, scratch_operands = 0 : i64, tpu.core_type = #tpu.core_type<tc>, window_params = [{transform_indices = @transform_0, window_bounds = array<i64: 1, 4, 16>}, {pipeline_mode = #tpu.pipeline_mode<synchronous>, transform_indices = @transform_1, window_bounds = array<i64: 16, 12>}, {pipeline_mode = #tpu.pipeline_mode<synchronous>, transform_indices = @transform_2, window_bounds = array<i64: 8, 1>}, {pipeline_mode = #tpu.pipeline_mode<synchronous>, transform_indices = @transform_3, window_bounds = array<i64: 8, 24>}, {pipeline_mode = #tpu.pipeline_mode<synchronous>, transform_indices = @transform_4, window_bounds = array<i64: 8, 1>}, {pipeline_mode = #tpu.pipeline_mode<synchronous>, transform_indices = @transform_5, window_bounds = array<i64: 8, 1>}, {transform_indices = @transform_6, window_bounds = array<i64: 1, 8, 16>}]} {
    %c0 = arith.constant 0 : index
    %c0_0 = arith.constant 0 : index
    %c0_1 = arith.constant 0 : index
    %0 = vector.load %arg2[%c0, %c0_0, %c0_1] : memref<1x4x16xbf16, #tpu.memory_space<vmem>>, vector<1x4x16xbf16>
    %1 = vector.shape_cast %0 : vector<1x4x16xbf16> to vector<4x16xbf16>
    %cst = arith.constant 0.000000e+00 : bf16
    %2 = vector.broadcast %cst : bf16 to vector<4x8xbf16>
    %3 = tpu.concatenate %2, %1 in 1 : vector<4x8xbf16>, vector<4x16xbf16> -> vector<4x24xbf16>
    %4 = vector.extract_strided_slice %3 {offsets = [0, 0], sizes = [4, 20], strides = [1, 1]} : vector<4x24xbf16> to vector<4x20xbf16>
    %5 = vector.extract_strided_slice %3 {offsets = [0, 2], sizes = [4, 20], strides = [1, 1]} : vector<4x24xbf16> to vector<4x20xbf16>
    %6 = vector.extract_strided_slice %3 {offsets = [0, 4], sizes = [4, 20], strides = [1, 1]} : vector<4x24xbf16> to vector<4x20xbf16>
    %7 = tpu.concatenate %4, %5, %6 in 0 : vector<4x20xbf16>, vector<4x20xbf16>, vector<4x20xbf16> -> vector<12x20xbf16>
    %c0_2 = arith.constant 0 : index
    %c0_3 = arith.constant 0 : index
    %8 = vector.load %arg3[%c0_2, %c0_3] : memref<16x12xbf16, #tpu.memory_space<vmem>>, vector<16x12xbf16>
    %cst_4 = arith.constant dense<0.000000e+00> : vector<16x20xf32>
    %9 = tpu.matmul %8, %7, %cst_4 {dimension_numbers = #tpu.dot_dimension_numbers<[1], [0], [0], [1], [0, 0, 1, 1], [], []>} : vector<16x12xbf16>, vector<12x20xbf16>, vector<16x20xf32> -> vector<16x20xf32>
    %10 = vector.extract_strided_slice %9 {offsets = [0, 0], sizes = [8, 20], strides = [1, 1]} : vector<16x20xf32> to vector<8x20xf32>
    %c0_5 = arith.constant 0 : index
    %c0_6 = arith.constant 0 : index
    %11 = vector.load %arg4[%c0_5, %c0_6] : memref<8x1xf32, #tpu.memory_space<vmem>>, vector<8x1xf32>
    %12 = vector.broadcast %11 : vector<8x1xf32> to vector<8x20xf32>
    %13 = arith.addf %10, %12 : vector<8x20xf32>
    %cst_7 = arith.constant 0.000000e+00 : f32
    %14 = vector.broadcast %cst_7 : f32 to vector<8x20xf32>
    %15 = arith.maximumf %13, %14 : vector<8x20xf32>
    %16 = tpu.iota {dimensions = array<i32: 1>} : vector<8x20xi32>
    %c4_i32 = arith.constant 4 : i32
    %17 = vector.broadcast %c4_i32 : i32 to vector<8x20xi32>
    %18 = arith.cmpi sge, %16, %17 : vector<8x20xi32>
    %cst_8 = arith.constant 0.000000e+00 : f32
    %19 = vector.broadcast %cst_8 : f32 to vector<8x20xf32>
    %20 = arith.select %18, %15, %19 : vector<8x20xi1>, vector<8x20xf32>
    %21 = vector.extract_strided_slice %9 {offsets = [8, 4], sizes = [8, 16], strides = [1, 1]} : vector<16x20xf32> to vector<8x16xf32>
    %c0_9 = arith.constant 0 : index
    %c0_10 = arith.constant 0 : index
    %22 = vector.load %arg7[%c0_9, %c0_10] : memref<8x1xf32, #tpu.memory_space<vmem>>, vector<8x1xf32>
    %23 = vector.broadcast %22 : vector<8x1xf32> to vector<8x16xf32>
    %24 = arith.addf %21, %23 : vector<8x16xf32>
    %25 = arith.truncf %20 : vector<8x20xf32> to vector<8x20xbf16>
    %26 = vector.extract_strided_slice %25 {offsets = [0, 0], sizes = [8, 16], strides = [1, 1]} : vector<8x20xbf16> to vector<8x16xbf16>
    %27 = vector.extract_strided_slice %25 {offsets = [0, 2], sizes = [8, 16], strides = [1, 1]} : vector<8x20xbf16> to vector<8x16xbf16>
    %28 = vector.extract_strided_slice %25 {offsets = [0, 4], sizes = [8, 16], strides = [1, 1]} : vector<8x20xbf16> to vector<8x16xbf16>
    %29 = tpu.concatenate %26, %27, %28 in 0 : vector<8x16xbf16>, vector<8x16xbf16>, vector<8x16xbf16> -> vector<24x16xbf16>
    %c0_11 = arith.constant 0 : index
    %c0_12 = arith.constant 0 : index
    %30 = vector.load %arg5[%c0_11, %c0_12] : memref<8x24xbf16, #tpu.memory_space<vmem>>, vector<8x24xbf16>
    %cst_13 = arith.constant dense<0.000000e+00> : vector<8x16xf32>
    %31 = tpu.matmul %30, %29, %cst_13 {dimension_numbers = #tpu.dot_dimension_numbers<[1], [0], [0], [1], [0, 0, 1, 1], [], []>} : vector<8x24xbf16>, vector<24x16xbf16>, vector<8x16xf32> -> vector<8x16xf32>
    %c0_14 = arith.constant 0 : index
    %c0_15 = arith.constant 0 : index
    %32 = vector.load %arg6[%c0_14, %c0_15] : memref<8x1xf32, #tpu.memory_space<vmem>>, vector<8x1xf32>
    %33 = vector.broadcast %32 : vector<8x1xf32> to vector<8x16xf32>
    %34 = arith.addf %31, %33 : vector<8x16xf32>
    %cst_16 = arith.constant 0.000000e+00 : f32
    %35 = vector.broadcast %cst_16 : f32 to vector<8x16xf32>
    %36 = arith.maximumf %34, %35 : vector<8x16xf32>
    %37 = arith.addf %36, %24 : vector<8x16xf32>
    %cst_17 = arith.constant 0.000000e+00 : f32
    %38 = vector.broadcast %cst_17 : f32 to vector<8x16xf32>
    %39 = arith.maximumf %37, %38 : vector<8x16xf32>
    %c0_18 = arith.constant 0 : index
    %c0_19 = arith.constant 0 : index
    %c0_20 = arith.constant 0 : index
    %40 = vector.load %arg8[%c0_18, %c0_19, %c0_20] : memref<1x8x16xf32, #tpu.memory_space<vmem>>, vector<1x8x16xf32>
    %41 = vector.shape_cast %40 : vector<1x8x16xf32> to vector<8x16xf32>
    %42 = vector.shape_cast %39 : vector<8x16xf32> to vector<1x8x16xf32>
    tpu.vector_store %arg8[%c0_18, %c0_19, %c0_20], %42 {strides = array<i32>} : memref<1x8x16xf32, #tpu.memory_space<vmem>>, vector<1x8x16xf32>,
    return
  }
  func.func @transform_0(%arg0: i32, %arg1: i32) -> (i32, i32, i32) {
    %c0_i32 = arith.constant 0 : i32
    %c0_i32_0 = arith.constant 0 : i32
    return %arg0, %c0_i32, %arg1 : i32, i32, i32
  }
  func.func @transform_1(%arg0: i32, %arg1: i32) -> (i32, i32) {
    %c0_i32 = arith.constant 0 : i32
    %c0_i32_0 = arith.constant 0 : i32
    %c0_i32_1 = arith.constant 0 : i32
    return %c0_i32, %c0_i32_0 : i32, i32
  }
  func.func @transform_2(%arg0: i32, %arg1: i32) -> (i32, i32) {
    %c0_i32 = arith.constant 0 : i32
    %c0_i32_0 = arith.constant 0 : i32
    %c0_i32_1 = arith.constant 0 : i32
    return %c0_i32, %c0_i32_0 : i32, i32
  }
  func.func @transform_3(%arg0: i32, %arg1: i32) -> (i32, i32) {
    %c0_i32 = arith.constant 0 : i32
    %c0_i32_0 = arith.constant 0 : i32
    %c0_i32_1 = arith.constant 0 : i32
    return %c0_i32, %c0_i32_0 : i32, i32
  }
  func.func @transform_4(%arg0: i32, %arg1: i32) -> (i32, i32) {
    %c0_i32 = arith.constant 0 : i32
    %c0_i32_0 = arith.constant 0 : i32
    %c0_i32_1 = arith.constant 0 : i32
    return %c0_i32, %c0_i32_0 : i32, i32
  }
  func.func @transform_5(%arg0: i32, %arg1: i32) -> (i32, i32) {
    %c0_i32 = arith.constant 0 : i32
    %c0_i32_0 = arith.constant 0 : i32
    %c0_i32_1 = arith.constant 0 : i32
    return %c0_i32, %c0_i32_0 : i32, i32
  }
  func.func @transform_6(%arg0: i32, %arg1: i32) -> (i32, i32, i32) {
    %c0_i32 = arith.constant 0 : i32
    %c0_i32_0 = arith.constant 0 : i32
    return %arg0, %c0_i32, %arg1 : i32, i32, i32
  }
}

</mosaic_0001>

<llo_original>
// kernel: tpu_custom_call.1
$region0: #{tpu_custom_call.1}
  #allocation0 [shape = 'u32[]', space=smem, size = 0x4, offset = 0x4, fixed_abs, tag = 'smem constant byte address 0x4 - core index']
  #allocation1 [shape = 'u32[72,128]{1,0:T(1,128)}', space=vmem, size = 0x9000, scoped, tag = 'internal scratch']
  %s0 = inlined_call_operand.vmem [shape: bf16[2,4,16], index: 0, kind: input, shape index: {}]
  %s1 = inlined_call_operand.vmem [shape: bf16[16,12], index: 1, kind: input, shape index: {}]
  %s2 = inlined_call_operand.vmem [shape: f32[8,1], index: 2, kind: input, shape index: {}]
  %s3 = inlined_call_operand.vmem [shape: bf16[8,24], index: 3, kind: input, shape index: {}]
  %s4 = inlined_call_operand.vmem [shape: f32[8,1], index: 4, kind: input, shape index: {}]
  %s5 = inlined_call_operand.vmem [shape: f32[8,1], index: 5, kind: input, shape index: {}]
  %s6 = inlined_call_operand.hbm [shape: f32[2,8,16], index: 6, kind: output, shape index: {}]
  %s7 = sld [smem:[#allocation0]]
  $region57: #{tpu_custom_call.1} parent=0
    _
  %s9 = ssub.s32 1, %s7
  %s10 = scalar_select 0, %s9, %s7
  $region1: #{tpu_custom_call.1} parent=0
    #allocation2 [shape = 'u8[8192]{0}', space=vmem, size = 0x2000, scoped, tag = 'output window, operand 0']
    #allocation3 [shape = 's32[2]{0}', space=sflag, size = 0x8, scoped, tag = 'scoped memory for tpu_custom_call.1']
    %11 = vsyncpa [#allocation3], 0
    %s12 = scalar_lea.sflag [#allocation3], 1
    %13 = vsyncpa %s12, 0
    loop: start=0, step=1, limit=4
    $region2: #{tpu_custom_call.1} parent=1 // loop_pre_header
      _
    $region3: #{tpu_custom_call.1} parent=1 // loop_header
      %s15 = sphi 0, %s19
      %p16 = scmp.ge.s32.totalorder %s15, 4
      %s22 = sphi 0, %s34
      %s23 = sphi 0, %s30
      %s24 = sphi 0, %s22
      %s25 = sphi 0, %s23
      %s26 = sphi 0, %s24
      %s27 = sphi 0, %s25
      %s39 = sphi 0, %s41
      %s42 = sphi 0, %s39
      %s43 = sphi 0, %s42
      %s59 = sphi 0, %s43
      %s63 = sphi 0, %s63
      %s65 = sphi 0, %s63
      %s66 = sphi 0, %s65
      %s80 = sphi 0, %s66
      %s84 = sphi 0, %s84
      %s86 = sphi 0, %s84
      %s87 = sphi 0, %s86
      %s101 = sphi 0, %s87
      %s105 = sphi 0, %s105
      %s107 = sphi 0, %s105
      %s108 = sphi 0, %s107
      %s122 = sphi 0, %s108
      %s126 = sphi 0, %s126
      %s128 = sphi 0, %s126
      %s129 = sphi 0, %s128
      %s143 = sphi 0, %s129
      %s147 = sphi 0, %s147
      %s149 = sphi 0, %s147
      %s150 = sphi 0, %s149
      %s164 = sphi 0, %s150
      %s172 = sphi 0, %s174
      %s175 = sphi 0, %s172
      %s176 = sphi 0, %s175
      %s192 = sphi 0, %s176
    $region4: #{tpu_custom_call.1} parent=1 // loop_header_branch
      %18 = sbr.rel (%p16) target = $region8
    $region5: #{tpu_custom_call.1} parent=1 // loop_body
      %s20 = ssub.s32 %s15, 1
      %s21 = ssub.s32 %s15, 2
      %s28 = sadd.s32 1, %s23
      %p29 = scmp.ge.s32.totalorder %s28, 1
      %s30 = scalar_select %p29, 0, %s28
      %s31 = sadd.s32 1, %s22
      %s32 = scalar_select %p29, %s31, %s22
      %p33 = scmp.ge.s32.totalorder %s32, 2
      %s34 = scalar_select %p33, 0, %s32
      %s35 = ssub.s32 %s22, %s34
      %s36 = ssub.s32 %s23, %s30
      %s37 = sor.u32 %s35, %s36
      %p38 = scmp.eq.s32.totalorder %s37, 0
      %s40 = sadd.s32 %s39, 1
      %s41 = scalar_select %p38, %s39, %s40
      %p44 = pneg %p38
      %p45 = scmp.eq.s32.totalorder %s15, 1
      %p46 = por %p44, %p45
      %p47 = scmp.ne.s32.totalorder %s39, %s42
      %p48 = scmp.eq.s32.totalorder %s15, 0
      %p49 = por %p47, %p48
      %p50 = scmp.ne.s32.totalorder %s39, %s42
      %p51 = scmp.eq.s32.totalorder %s20, 1
      %p52 = por %p50, %p51
      %p53 = scmp.ne.s32.totalorder %s42, %s43
      %p54 = scmp.eq.s32.totalorder %s20, 0
      %p55 = por %p53, %p54
      %p56 = scmp.ne.s32.totalorder %s42, %s43
      %p57 = scmp.eq.s32.totalorder %s21, 1
      %p58 = por %p56, %p57
      %p60 = scmp.ne.s32.totalorder %s43, %s59
      %p61 = scmp.eq.s32.totalorder %s21, 0
      %p62 = por %p60, %p61
      %s64 = sadd.s32 %s63, 1
      %p67 = scmp.eq.s32.totalorder %s15, 1
      %p68 = scmp.ne.s32.totalorder %s63, %s65
      %p69 = scmp.eq.s32.totalorder %s15, 0
      %p70 = por %p68, %p69
      %p71 = scmp.ne.s32.totalorder %s63, %s65
      %p72 = scmp.eq.s32.totalorder %s20, 1
      %p73 = por %p71, %p72
      %p74 = scmp.ne.s32.totalorder %s65, %s66
      %p75 = scmp.eq.s32.totalorder %s20, 0
      %p76 = por %p74, %p75
      %p77 = scmp.ne.s32.totalorder %s65, %s66
      %p78 = scmp.eq.s32.totalorder %s21, 1
      %p79 = por %p77, %p78
      %p81 = scmp.ne.s32.totalorder %s66, %s80
      %p82 = scmp.eq.s32.totalorder %s21, 0
      %p83 = por %p81, %p82
      %s85 = sadd.s32 %s84, 1
      %p88 = scmp.eq.s32.totalorder %s15, 1
      %p89 = scmp.ne.s32.totalorder %s84, %s86
      %p90 = scmp.eq.s32.totalorder %s15, 0
      %p91 = por %p89, %p90
      %p92 = scmp.ne.s32.totalorder %s84, %s86
      %p93 = scmp.eq.s32.totalorder %s20, 1
      %p94 = por %p92, %p93
      %p95 = scmp.ne.s32.totalorder %s86, %s87
      %p96 = scmp.eq.s32.totalorder %s20, 0
      %p97 = por %p95, %p96
      %p98 = scmp.ne.s32.totalorder %s86, %s87
      %p99 = scmp.eq.s32.totalorder %s21, 1
      %p100 = por %p98, %p99
      %p102 = scmp.ne.s32.totalorder %s87, %s101
      %p103 = scmp.eq.s32.totalorder %s21, 0
      %p104 = por %p102, %p103
      %s106 = sadd.s32 %s105, 1
      %p109 = scmp.eq.s32.totalorder %s15, 1
      %p110 = scmp.ne.s32.totalorder %s105, %s107
      %p111 = scmp.eq.s32.totalorder %s15, 0
      %p112 = por %p110, %p111
      %p113 = scmp.ne.s32.totalorder %s105, %s107
      %p114 = scmp.eq.s32.totalorder %s20, 1
      %p115 = por %p113, %p114
      %p116 = scmp.ne.s32.totalorder %s107, %s108
      %p117 = scmp.eq.s32.totalorder %s20, 0
      %p118 = por %p116, %p117
      %p119 = scmp.ne.s32.totalorder %s107, %s108
      %p120 = scmp.eq.s32.totalorder %s21, 1
      %p121 = por %p119, %p120
      %p123 = scmp.ne.s32.totalorder %s108, %s122
      %p124 = scmp.eq.s32.totalorder %s21, 0
      %p125 = por %p123, %p124
      %s127 = sadd.s32 %s126, 1
      %p130 = scmp.eq.s32.totalorder %s15, 1
      %p131 = scmp.ne.s32.totalorder %s126, %s128
      %p132 = scmp.eq.s32.totalorder %s15, 0
      %p133 = por %p131, %p132
      %p134 = scmp.ne.s32.totalorder %s126, %s128
      %p135 = scmp.eq.s32.totalorder %s20, 1
      %p136 = por %p134, %p135
      %p137 = scmp.ne.s32.totalorder %s128, %s129
      %p138 = scmp.eq.s32.totalorder %s20, 0
      %p139 = por %p137, %p138
      %p140 = scmp.ne.s32.totalorder %s128, %s129
      %p141 = scmp.eq.s32.totalorder %s21, 1
      %p142 = por %p140, %p141
      %p144 = scmp.ne.s32.totalorder %s129, %s143
      %p145 = scmp.eq.s32.totalorder %s21, 0
      %p146 = por %p144, %p145
      %s148 = sadd.s32 %s147, 1
      %p151 = scmp.eq.s32.totalorder %s15, 1
      %p152 = scmp.ne.s32.totalorder %s147, %s149
      %p153 = scmp.eq.s32.totalorder %s15, 0
      %p154 = por %p152, %p153
      %p155 = scmp.ne.s32.totalorder %s147, %s149
      %p156 = scmp.eq.s32.totalorder %s20, 1
      %p157 = por %p155, %p156
      %p158 = scmp.ne.s32.totalorder %s149, %s150
      %p159 = scmp.eq.s32.totalorder %s20, 0
      %p160 = por %p158, %p159
      %p161 = scmp.ne.s32.totalorder %s149, %s150
      %p162 = scmp.eq.s32.totalorder %s21, 1
      %p163 = por %p161, %p162
      %p165 = scmp.ne.s32.totalorder %s150, %s164
      %p166 = scmp.eq.s32.totalorder %s21, 0
      %p167 = por %p165, %p166
      %s168 = ssub.s32 %s22, %s34
      %s169 = ssub.s32 %s23, %s30
      %s170 = sor.u32 %s168, %s169
      %p171 = scmp.eq.s32.totalorder %s170, 0
      %s173 = sadd.s32 %s172, 1
      %s174 = scalar_select %p171, %s172, %s173
      %p177 = pneg %p171
      %p178 = scmp.eq.s32.totalorder %s15, 1
      %p179 = por %p177, %p178
      %p180 = scmp.ne.s32.totalorder %s172, %s175
      %p181 = scmp.eq.s32.totalorder %s15, 0
      %p182 = por %p180, %p181
      %p183 = scmp.ne.s32.totalorder %s172, %s175
      %p184 = scmp.eq.s32.totalorder %s20, 1
      %p185 = por %p183, %p184
      %p186 = scmp.ne.s32.totalorder %s175, %s176
      %p187 = scmp.eq.s32.totalorder %s20, 0
      %p188 = por %p186, %p187
      %p189 = scmp.ne.s32.totalorder %s175, %s176
      %p190 = scmp.eq.s32.totalorder %s21, 1
      %p191 = por %p189, %p190
      %p193 = scmp.ne.s32.totalorder %s176, %s192
      %p194 = scmp.eq.s32.totalorder %s21, 0
      %p195 = por %p193, %p194
      %p196 = scmp.le.s32.totalorder 1, %s15
      %p197 = scmp.lt.s32.totalorder %s15, 3
      %p198 = pnand %p196, %p197
      %p199 = pneg %p198
      // Predicated region
      $region9: #{tpu_custom_call.1} parent=5 // pred_check
        _
      $region10: #{tpu_custom_call.1} parent=5 // pred_check_branch
        %201 = sbr.rel (%p198) target = $region12
      $region11: #{tpu_custom_call.1} parent=5 // pred_region
        %s202 = ssub.s32 %s15, 1
        // Predicated region
        $region13: #{tpu_custom_call.1} parent=11 // pred_check
          %p203 = pneg %p76
        $region14: #{tpu_custom_call.1} parent=11 // pred_check_branch
          %205 = sbr.rel (%p203) target = $region16
        $region15: #{tpu_custom_call.1} parent=11 // pred_region
          _
        $region16: #{tpu_custom_call.1} parent=11 // pred_fallthru
          _
        // Predicated region
        $region17: #{tpu_custom_call.1} parent=11 // pred_check
          %p206 = pneg %p97
        $region18: #{tpu_custom_call.1} parent=11 // pred_check_branch
          %208 = sbr.rel (%p206) target = $region20
        $region19: #{tpu_custom_call.1} parent=11 // pred_region
          _
        $region20: #{tpu_custom_call.1} parent=11 // pred_fallthru
          _
        // Predicated region
        $region21: #{tpu_custom_call.1} parent=11 // pred_check
          %p209 = pneg %p118
        $region22: #{tpu_custom_call.1} parent=11 // pred_check_branch
          %211 = sbr.rel (%p209) target = $region24
        $region23: #{tpu_custom_call.1} parent=11 // pred_region
          _
        $region24: #{tpu_custom_call.1} parent=11 // pred_fallthru
          _
        // Predicated region
        $region25: #{tpu_custom_call.1} parent=11 // pred_check
          %p212 = pneg %p139
        $region26: #{tpu_custom_call.1} parent=11 // pred_check_branch
          %214 = sbr.rel (%p212) target = $region28
        $region27: #{tpu_custom_call.1} parent=11 // pred_region
          _
        $region28: #{tpu_custom_call.1} parent=11 // pred_fallthru
          _
        // Predicated region
        $region29: #{tpu_custom_call.1} parent=11 // pred_check
          %p215 = pneg %p160
        $region30: #{tpu_custom_call.1} parent=11 // pred_check_branch
          %217 = sbr.rel (%p215) target = $region32
        $region31: #{tpu_custom_call.1} parent=11 // pred_region
          _
        $region32: #{tpu_custom_call.1} parent=11 // pred_fallthru
          _
      $region12: #{tpu_custom_call.1} parent=5 // pred_fallthru
        _
      %p218 = scmp.lt.s32.totalorder %s15, 2
      // Predicated region
      $region33: #{tpu_custom_call.1} parent=5 // pred_check
        %p219 = pneg %p218
      $region34: #{tpu_custom_call.1} parent=5 // pred_check_branch
        %221 = sbr.rel (%p219) target = $region36
      $region35: #{tpu_custom_call.1} parent=5 // pred_region
        // Predicated region
        $region37: #{tpu_custom_call.1} parent=35 // pred_check
          %p222 = pneg %p49
        $region38: #{tpu_custom_call.1} parent=35 // pred_check_branch
          %224 = sbr.rel (%p222) target = $region40
        $region39: #{tpu_custom_call.1} parent=35 // pred_region
          %p225 = scmp.lt.s32.totalorder %s22, 1
          %s226 = scalar_select %p225, %s22, 1
          %p227 = scmp.lt.s32.totalorder %s23, 0
          %s228 = scalar_select %p227, %s23, 0
          %s229 = sadd.s32 %s228, %s226
          %s230 = smul.addr %s229, 2
          %s231 = scalar_lea.vmem %s0, %s230
        $region40: #{tpu_custom_call.1} parent=35 // pred_fallthru
          _
      $region36: #{tpu_custom_call.1} parent=5 // pred_fallthru
        _
      %p232 = scmp.le.s32.totalorder 1, %s15
      %p233 = scmp.lt.s32.totalorder %s15, 3
      %p234 = pnand %p232, %p233
      %p235 = pneg %p234
      // Predicated region
      $region41: #{tpu_custom_call.1} parent=5 // pred_check
        _
      $region42: #{tpu_custom_call.1} parent=5 // pred_check_branch
        %237 = sbr.rel (%p234) target = $region44
      $region43: #{tpu_custom_call.1} parent=5 // pred_region
        %s238 = ssub.s32 %s15, 1
        %p239 = scmp.lt.s32.totalorder %s24, 1
        %s240 = scalar_select %p239, %s24, 1
        %p241 = scmp.lt.s32.totalorder %s25, 0
        %s242 = scalar_select %p241, %s25, 0
        %s243 = sadd.s32 %s242, %s240
        %s244 = smul.addr %s243, 2
        %s245 = scalar_lea.vmem %s0, %s244
        %p246 = pneg %p55
        %p247 = pneg %p52
        %p248 = pneg %p76
        %p249 = pneg %p73
        %p250 = pneg %p97
        %p251 = pneg %p94
        %p252 = pneg %p118
        %p253 = pneg %p115
        %p254 = pneg %p139
        %p255 = pneg %p136
        %p256 = pneg %p160
        %p257 = pneg %p157
        %p258 = pneg %p188
        %p259 = pneg %p185
        %s260 = sand.u32 %s175, 1
        %s261 = scalar_lea.sflag [#allocation3], %s260
        %s262 = sand.u32 %s175, 1
        %s263 = smul.addr %s262, 8
        %s264 = scalar_lea.vmem [#allocation2], %s263
        %p265 = scmp.lt.s32.totalorder %s24, 1
        %s266 = scalar_select %p265, %s24, 1
        %p267 = scmp.lt.s32.totalorder %s25, 0
        %s268 = scalar_select %p267, %s25, 0
        %s269 = sadd.s32 %s268, %s266
        %s270 = smul.addr %s269, 2
        %s271 = scalar_lea.vmem %s0, %s270
        %v273 = vld [vmem:[%s271] sm:$0x3]
        %275 = vst [vmem:[#allocation1] ss:$4 sm:$0xff] %v273
        %v276 = vld.sshfl [vmem:[#allocation1] sm:$0xff pattern:$0x73625140]
        %278 = vrot.lane.b32.xlu0 %v276, 8
        %v279 = vpop.permute.xlu0 %278
        %vm280 = vcmask 64512
        %v283 = vsel %vm280, 0, %v279
        %v285 = vrot.slane %v283, 6
        %286 = vrot.lane.b32.xlu0 %v285, 126
        %v287 = vpop.permute.xlu0 %286
        %v288 = vrot.slane %v283, 4
        %289 = vrot.lane.b32.xlu0 %v288, 124
        %v290 = vpop.permute.xlu0 %289
        %vm291 = vcmask 1041408
        %v293 = vsel %vm291, %v283, %v287
        %vm294 = vcmask 1043456
        %v296 = vsel %vm294, %v293, %v290
        %v297 = vld [vmem:[%s1] sm:$0xf]
        %v298 = vld [vmem:[%s1 + $0x4] sm:$0xf]
        %v301 = vunpack.c.l.b16 %v297
        %v302 = vunpack.c.l.b16 %v298
        %v303 = vpack.c.b16 %v302, %v301
        %vm304 = vcmask 97280
        %v306 = vsel %vm304, %v303, 0
        %vm308 = vcmask 1045504
        %v309 = vsel %vm308, %v296, 0
        %311 = vmatpush.bf16.msra.mxu0 0
        %312 = vmatpush.bf16.msra.mxu0 0
        %313 = vmatpush.bf16.msra.mxu0 0
        %314 = vmatpush.bf16.msra.mxu0 0
        %315 = vmatpush.bf16.msra.mxu0 0
        %316 = vmatpush.bf16.msra.mxu0 0
        %317 = vmatpush.bf16.msra.mxu0 0
        %318 = vmatpush.bf16.msra.mxu0 %v309
        %319 = vmatmul.bf16.gmra.mxu0 %v306
        %v320 = vpop.f32.mrf.mxu0
        %v321 = vadd.f32 0.0, %v320
        %v322 = vpop.f32.mrf.mxu0
        %v323 = vadd.f32 0.0, %v322
        %324 = vdwg.mxu0
        %v325 = vld [vmem:[%s2] sm:$0xff]
        %327 = vset.pattern.permute.xlu0 0
        %328 = vperm.xlu0 %327, %v325
        %v329 = vpop.permute.xlu0 %328
        %v331 = vadd.f32 %v321, %v329
        %v332 = vmax.f32 %v331, 0.0
        %v333 = vlaneseq
        %v334 = vand.u32 %v333, 127
        %vm335 = vcmp.ge.s32.totalorder %v334, 4
        %v336 = vsel %vm335, %v332, 0.0
        %v337 = vld [vmem:[%s5] sm:$0xff]
        %339 = vset.pattern.permute.xlu0 0
        %340 = vperm.xlu0 %339, %v337
        %v341 = vpop.permute.xlu0 %340
        %v343 = vadd.f32 %v323, %v341
        %v344 = vpack.c.bf16 %v336, %v336
        %v346 = vunpack.c.l.b16 %v344
        %v347 = vpack.c.b16 %v346, %v346
        %348 = vrot.lane.b32.xlu0 %v347, 126
        %v349 = vpop.permute.xlu0 %348
        %350 = vrot.lane.b32.xlu0 %v347, 124
        %v351 = vpop.permute.xlu0 %350
        %v354 = vsel %vm294, %v344, %v349
        %v356 = vld [vmem:[%s3] sm:$0xf]
        %v357 = vld [vmem:[%s4] sm:$0xff]
        %359 = vset.pattern.permute.xlu0 0
        %360 = vperm.xlu0 %359, %v357
        %v361 = vpop.permute.xlu0 %360
        %vm363 = vcmask 195584
        %v365 = vsel %vm363, %v356, 0
        %v368 = vsel %vm294, %v351, 0
        %370 = vmatpush.bf16.msra.mxu0 0
        %371 = vmatpush.bf16.msra.mxu0 0
        %372 = vmatpush.bf16.msra.mxu0 0
        %373 = vmatpush.bf16.msra.mxu0 0
        %374 = vmatpush.bf16.msra.mxu0 0
        %375 = vmatpush.bf16.msra.mxu0 0
        %376 = vmatpush.bf16.msra.mxu0 %v368
        %377 = vmatpush.bf16.msra.mxu0 %v354
        %378 = vmatmul.bf16.gmra.mxu0 %v365
        %v379 = vpop.f32.mrf.mxu0
        %v380 = vadd.f32 %v361, %v379
        %v381 = vpop.f32.mrf.mxu0
        %382 = vdwg.mxu0
        %v383 = vmax.f32 %v380, 0.0
        %385 = vrot.lane.b32.xlu0 %v343, 124
        %v386 = vpop.permute.xlu0 %385
        %v388 = vadd.f32 %v383, %v386
        %v389 = vmax.f32 %v388, 0.0
        %vm390 = vcmask 130048
        %391 = vst.msk [vmem:[%s264] sm:$0xff] %vm390, %v389
        %s392 = sand.u32 %s175, 1
        %s393 = scalar_lea.sflag [#allocation3], %s392
        %s394 = sand.u32 %s175, 1
        %s395 = smul.addr %s394, 8
        %s396 = scalar_lea.vmem [#allocation2], %s395
        // Predicated region
        $region45: #{tpu_custom_call.1} parent=43 // pred_check
          %p397 = pneg %p185
        $region46: #{tpu_custom_call.1} parent=43 // pred_check_branch
          %399 = sbr.rel (%p397) target = $region48
        $region47: #{tpu_custom_call.1} parent=43 // pred_region
          %401 = vsyncadd %s393, 0
          %s402 = sadd.s32 %s25, %s24
          %s403 = smul.addr %s402, 8
          %s404 = scalar_lea.hbm %s6, %s403
          %s406 = sshll.u32 %s396, 4
          %s407 = int_to_ptr.vmem [resolvable:$true] %s406
          %s408 = sshll.u32 %s404, 4
          %s409 = int_to_ptr.hbm [resolvable:$true] %s408
          %411 = dma.vmem_to_hbm [thread:$0]  %s407, 128, %s409, %s393
        $region48: #{tpu_custom_call.1} parent=43 // pred_fallthru
          _
      $region44: #{tpu_custom_call.1} parent=5 // pred_fallthru
        _
      %p412 = scmp.le.s32.totalorder 2, %s15
      // Predicated region
      $region49: #{tpu_custom_call.1} parent=5 // pred_check
        %p413 = pneg %p412
      $region50: #{tpu_custom_call.1} parent=5 // pred_check_branch
        %415 = sbr.rel (%p413) target = $region52
      $region51: #{tpu_custom_call.1} parent=5 // pred_region
        %s416 = ssub.s32 %s15, 2
        // Predicated region
        $region53: #{tpu_custom_call.1} parent=51 // pred_check
          %p417 = pneg %p191
        $region54: #{tpu_custom_call.1} parent=51 // pred_check_branch
          %419 = sbr.rel (%p417) target = $region56
        $region55: #{tpu_custom_call.1} parent=51 // pred_region
          %s420 = sand.u32 %s176, 1
          %s421 = scalar_lea.sflag [#allocation3], %s420
          %s422 = sand.u32 %s176, 1
          %s423 = smul.addr %s422, 8
          %s424 = scalar_lea.vmem [#allocation2], %s423
          %426 = dma.done %s421, 128
        $region56: #{tpu_custom_call.1} parent=51 // pred_fallthru
          _
      $region52: #{tpu_custom_call.1} parent=5 // pred_fallthru
        _
    $region6: #{tpu_custom_call.1} parent=1 // loop_footer
      %s19 = sadd.s32 1, %s15
    $region7: #{tpu_custom_call.1} parent=1 // loop_footer_branch
      %14 = sbr.rel target = $region3
    $region8: #{tpu_custom_call.1} parent=1 // loop_exit
      _
    %427 = vsyncpa [#allocation3], 1
    %s428 = scalar_lea.sflag [#allocation3], 1
    %429 = vsyncpa %s428, 1

</llo_original>
